<compile_context>
chip_gen: v7x
topology: tpu7x:2x2x1
jax: 0.10.0
libtpu: 0.0.40
codegen_flags: <defaults>
</compile_context>

<pallas_src>
import functools

import jax
import jax.numpy as jnp
from jax.experimental import pallas as pl
from jax.experimental.pallas import tpu as pltpu

_LANES = 128
_PAD_LOGIT = -30000.0   # padded element: sigmoid->0, bce->0, loss term == 0


def _int_pow(x, p):
    """x**p via square-and-multiply for small non-negative integer p."""
    if float(p) == float(int(p)) and 0 <= int(p) <= 64:
        n = int(p)
        if n == 0:
            return jnp.ones_like(x)
        result = None
        base = x
        while True:
            if n & 1:
                result = base if result is None else result * base
            n >>= 1
            if n == 0:
                break
            base = base * base
        return result
    return jnp.power(x, p)


def _multilabel_loss_kernel(x_ref, z_ref, w_ref, out_ref, *,
                            gamma, beta, fl_weight, asl_weight,
                            last_valid_rows):
    x = x_ref[...].astype(jnp.float32)      # (TB, CK)
    z = z_ref[...].astype(jnp.float32)      # (TB, CK)
    wrow = w_ref[...].astype(jnp.float32)   # (1, CK), already * wbce_weight

    tb, ck = x.shape

    # Sigmoid + numerically stable BCE-with-logits sharing exp(-|x|) and 1+e.
    e = jnp.exp(-jnp.abs(x))                        # EUP exp (shared)
    one_p_e = 1.0 + e
    inv = pl.reciprocal(one_p_e, approx=True)       # EUP vrcp
    p = jnp.where(x >= 0.0, inv, e * inv)           # sigmoid(x)
    bce = jnp.maximum(x, 0.0) - x * z + jnp.log(one_p_e)

    # 1 - pt == p + z - 2*p*z   (pt = z*p + (1-z)*(1-p)), no pt round-trip.
    one_m_pt = p + z - 2.0 * (p * z)

    # combined = bce * (wbce_w*w + fl_w*(1-pt)^gamma + asl_w*(z+(1-z)*p^beta))
    scale = (wrow
             + fl_weight * _int_pow(one_m_pt, gamma)
             + asl_weight * (z + (1.0 - z) * _int_pow(p, beta)))
    combined = bce * scale

    def _partial(v):
        # Sublane-group fold: layout-preserving reshape + VPU adds (no XLU);
        # the tiny cross-lane reduction of all partials happens in the wrapper.
        return v.reshape(tb // 8, 8, ck).sum(axis=0)

    if last_valid_rows == tb:
        # Every block (incl. the last) is fully populated: no mask anywhere.
        out_ref[...] = _partial(combined)
    else:
        not_last = pl.program_id(0) != pl.num_programs(0) - 1

        @pl.when(not_last)
        def _():
            out_ref[...] = _partial(combined)       # unmasked fast path

        @pl.when(jnp.logical_not(not_last))
        def _():
            # Only the ragged last block can hold garbage rows from the
            # partial DMA; a select drops any NaN/Inf from them.
            row = jax.lax.broadcasted_iota(jnp.int32, (tb, ck), 0)
            out_ref[...] = _partial(
                jnp.where(row < last_valid_rows, combined, 0.0))


def multilabel_loss(logits, targets, class_weights, *,
                    gamma=2.0, beta=4.0,
                    wbce_weight=0.5, fl_weight=0.25, asl_weight=0.25,
                    target_tile_bytes=2 * 1024 * 1024,
                    vmem_limit_bytes=48 * 1024 * 1024,
                    input_buffers=None):
    """Pallas implementation of MultiLabelLoss.forward.

    logits, targets: (B, C); class_weights: (C,). Returns the scalar mean loss.
    Narrow dtypes (bf16 logits, int8/bool targets) are upcast in-kernel.
    """
    B, C = logits.shape
    n_true = B * C

    # Fold wbce_weight into the class-weight row once (tiny (C,) op).
    w = class_weights.astype(jnp.float32).reshape(-1) * wbce_weight

    # ---- layout: make the lane (last) axis dense where it is free ---------
    if C < _LANES and _LANES % C == 0:
        # Fold batch rows into the 128-lane axis via a free reshape of the
        # flat (B*C,) data; only a <128-element tail pad may remain, and its
        # pad values contribute exactly 0 to the loss.
        ck = _LANES
        flat = B * C
        tail = (-flat) % _LANES
        x_flat = logits.reshape(-1)
        z_flat = targets.reshape(-1)
        if tail:
            x_flat = jnp.pad(x_flat, (0, tail), constant_values=_PAD_LOGIT)
            z_flat = jnp.pad(z_flat, (0, tail))
        rows = (flat + tail) // _LANES
        x2 = x_flat.reshape(rows, ck)
        z2 = z_flat.reshape(rows, ck)
        w_row = jnp.tile(w, _LANES // C).reshape(1, ck)
    else:
        # Full class axis as the (un-padded) last block dim; Mosaic masks
        # non-128-multiple lane extents internally.  No HBM pad pass.
        ck = C
        rows = B
        x2, z2 = logits, targets
        w_row = w.reshape(1, ck)

    # ---- batch tile: multiple of 8 rows, sized by VMEM footprint ----------
    lane_cols = -(-ck // _LANES) * _LANES            # lane padding inside VMEM
    bytes_per_row = lane_cols * 4                    # conservative (f32 temps)
    tb_target = max(8, (target_tile_bytes // bytes_per_row) // 8 * 8)
    # Keep a few grid steps for v7x's 2 TensorCores, but never shrink a tile
    # below ~1 MiB of footprint (per-step overhead amortization).
    tb_grid4 = max(8, (-(-rows // 4) + 7) // 8 * 8)
    tb_floor = max(8, ((1 << 20) // bytes_per_row) // 8 * 8)
    tb = min(tb_target, max(tb_grid4, tb_floor))
    tb = min(tb, -(-rows // 8) * 8)                  # don't exceed the data

    grid_n = -(-rows // tb)                          # ragged last block is OK
    last_valid_rows = rows - (grid_n - 1) * tb

    kernel = functools.partial(
        _multilabel_loss_kernel,
        gamma=gamma, beta=beta, fl_weight=fl_weight, asl_weight=asl_weight,
        last_valid_rows=last_valid_rows)

    n_elems = rows * ck
    cost = pl.CostEstimate(
        flops=25 * n_elems,
        transcendentals=3 * n_elems,     # exp + log + approx-rcp per element
        bytes_accessed=(x2.size * x2.dtype.itemsize
                        + z2.size * z2.dtype.itemsize
                        + w_row.size * 4
                        + grid_n * 8 * ck * 4))

    def _in_spec():
        if input_buffers is not None and input_buffers != 2:
            return pl.BlockSpec((tb, ck), lambda i: (i, 0),
                                pipeline_mode=pl.Buffered(input_buffers))
        return pl.BlockSpec((tb, ck), lambda i: (i, 0))

    partials = pl.pallas_call(
        kernel,
        out_shape=jax.ShapeDtypeStruct((grid_n * 8, ck), jnp.float32),
        grid=(grid_n,),
        in_specs=[
            _in_spec(),                                 # logits tile
            _in_spec(),                                 # targets tile
            pl.BlockSpec((1, ck), lambda i: (0, 0)),    # class-weight row
        ],
        out_specs=pl.BlockSpec((8, ck), lambda i: (i, 0)),
        compiler_params=pltpu.CompilerParams(
            dimension_semantics=("parallel",),
            vmem_limit_bytes=vmem_limit_bytes),
        cost_estimate=cost,
    )(x2, z2, w_row)

    return jnp.sum(partials) * (1.0 / n_true)


def _reference_loss(logits, targets, class_weights, *,
                    gamma=2.0, beta=4.0,
                    wbce_weight=0.5, fl_weight=0.25, asl_weight=0.25):
    """Pure-JAX reference mirroring the PyTorch module."""
    x = logits.astype(jnp.float32)
    z = targets.astype(jnp.float32)
    w = class_weights.astype(jnp.float32)
    p = jax.nn.sigmoid(x)
    bce = jnp.maximum(x, 0.0) - x * z + jnp.log1p(jnp.exp(-jnp.abs(x)))
    wbce = w[None, :] * bce
    pt = z * p + (1 - z) * (1 - p)
    fl = bce * (1 - pt) ** gamma
    asl = z * bce + (1 - z) * bce * p ** beta
    combined = wbce_weight * wbce + fl_weight * fl + asl_weight * asl
    return combined.mean()


if __name__ == "__main__":
    key = jax.random.PRNGKey(0)
    k1, k2, k3, k4 = jax.random.split(key, 4)

    # Case 1: small C (module-typical (B, num_classes)) -> lane-folded path.
    B, num_classes = 4, 16
    logits = jax.random.normal(k1, (B, num_classes), dtype=jnp.float32)
    targets = (jax.random.uniform(k2, (B, num_classes)) > 0.5).astype(jnp.float32)
    class_weights = 0.5 + jnp.arange(num_classes, dtype=jnp.float32) / num_classes

    loss = jax.block_until_ready(multilabel_loss(logits, targets, class_weights))
    ref = _reference_loss(logits, targets, class_weights)
    assert jnp.allclose(loss, ref, rtol=2e-3, atol=2e-3), (loss, ref)

    # Case 2: C not a divisor/multiple of 128 -> full-C-block (no pad) path.
    B2, C2 = 32, 160
    logits2 = jax.random.normal(k3, (B2, C2), dtype=jnp.float32)
    targets2 = (jax.random.uniform(k4, (B2, C2)) > 0.5).astype(jnp.float32)
    class_weights2 = 0.75 + 0.5 * jnp.cos(jnp.arange(C2, dtype=jnp.float32))

    loss2 = jax.block_until_ready(multilabel_loss(logits2, targets2, class_weights2))
    ref2 = _reference_loss(logits2, targets2, class_weights2)
    assert jnp.allclose(loss2, ref2, rtol=2e-3, atol=2e-3), (loss2, ref2)

    print("KERNEL_OK")
</pallas_src>

<mosaic_0001>
module attributes {stable_mosaic.version = 11 : i64} {
  func.func @_multilabel_loss_kernel(%arg0: i32, %arg1: memref<8x128xf32, #tpu.memory_space<vmem>>, %arg2: memref<8x128xf32, #tpu.memory_space<vmem>>, %arg3: memref<1x128xf32, #tpu.memory_space<vmem>>, %arg4: memref<8x128xf32, #tpu.memory_space<vmem>>) attributes {dimension_semantics = [#tpu.dimension_semantics<parallel>], iteration_bounds = array<i64: 1>, scalar_prefetch = 0 : i64, scratch_operands = 0 : i64, tpu.core_type = #tpu.core_type<tc>, window_params = [{transform_indices = @transform_0, window_bounds = array<i64: 8, 128>}, {transform_indices = @transform_1, window_bounds = array<i64: 8, 128>}, {pipeline_mode = #tpu.pipeline_mode<synchronous>, transform_indices = @transform_2, window_bounds = array<i64: 1, 128>}, {transform_indices = @transform_3, window_bounds = array<i64: 8, 128>}]} {
    %c0 = arith.constant 0 : index
    %c0_0 = arith.constant 0 : index
    %0 = vector.load %arg1[%c0, %c0_0] : memref<8x128xf32, #tpu.memory_space<vmem>>, vector<8x128xf32>
    %c0_1 = arith.constant 0 : index
    %c0_2 = arith.constant 0 : index
    %1 = vector.load %arg2[%c0_1, %c0_2] : memref<8x128xf32, #tpu.memory_space<vmem>>, vector<8x128xf32>
    %c0_3 = arith.constant 0 : index
    %c0_4 = arith.constant 0 : index
    %2 = vector.load %arg3[%c0_3, %c0_4] : memref<1x128xf32, #tpu.memory_space<vmem>>, vector<1x128xf32>
    %3 = math.absf %0 : vector<8x128xf32>
    %cst = arith.constant 0.000000e+00 : f32
    %4 = vector.broadcast %cst : f32 to vector<8x128xf32>
    %5 = arith.subf %4, %3 : vector<8x128xf32>
    %6 = math.exp %5 : vector<8x128xf32>
    %cst_5 = arith.constant 1.000000e+00 : f32
    %7 = vector.broadcast %cst_5 : f32 to vector<8x128xf32>
    %8 = arith.addf %7, %6 : vector<8x128xf32>
    %9 = tpu.reciprocal %8 {approx = true} : vector<8x128xf32> -> vector<8x128xf32>
    %cst_6 = arith.constant 0.000000e+00 : f32
    %10 = vector.broadcast %cst_6 : f32 to vector<8x128xf32>
    %11 = arith.cmpf oge, %0, %10 : vector<8x128xf32>
    %12 = arith.mulf %6, %9 : vector<8x128xf32>
    %13 = arith.select %11, %9, %12 : vector<8x128xi1>, vector<8x128xf32>
    %cst_7 = arith.constant 0.000000e+00 : f32
    %14 = vector.broadcast %cst_7 : f32 to vector<8x128xf32>
    %15 = arith.maximumf %0, %14 : vector<8x128xf32>
    %16 = arith.mulf %0, %1 : vector<8x128xf32>
    %17 = arith.subf %15, %16 : vector<8x128xf32>
    %18 = math.log %8 : vector<8x128xf32>
    %19 = arith.addf %17, %18 : vector<8x128xf32>
    %20 = arith.addf %13, %1 : vector<8x128xf32>
    %21 = arith.mulf %13, %1 : vector<8x128xf32>
    %cst_8 = arith.constant 2.000000e+00 : f32
    %22 = vector.broadcast %cst_8 : f32 to vector<8x128xf32>
    %23 = arith.mulf %22, %21 : vector<8x128xf32>
    %24 = arith.subf %20, %23 : vector<8x128xf32>
    %25 = arith.mulf %24, %24 : vector<8x128xf32>
    %cst_9 = arith.constant 2.500000e-01 : f32
    %26 = vector.broadcast %cst_9 : f32 to vector<8x128xf32>
    %27 = arith.mulf %26, %25 : vector<8x128xf32>
    %28 = vector.broadcast %2 : vector<1x128xf32> to vector<8x128xf32>
    %29 = arith.addf %28, %27 : vector<8x128xf32>
    %cst_10 = arith.constant 1.000000e+00 : f32
    %30 = vector.broadcast %cst_10 : f32 to vector<8x128xf32>
    %31 = arith.subf %30, %1 : vector<8x128xf32>
    %32 = arith.mulf %13, %13 : vector<8x128xf32>
    %33 = arith.mulf %32, %32 : vector<8x128xf32>
    %34 = arith.mulf %31, %33 : vector<8x128xf32>
    %35 = arith.addf %1, %34 : vector<8x128xf32>
    %cst_11 = arith.constant 2.500000e-01 : f32
    %36 = vector.broadcast %cst_11 : f32 to vector<8x128xf32>
    %37 = arith.mulf %36, %35 : vector<8x128xf32>
    %38 = arith.addf %29, %37 : vector<8x128xf32>
    %39 = arith.mulf %19, %38 : vector<8x128xf32>
    %c0_i32 = arith.constant 0 : i32
    %40 = arith.cmpi ne, %arg0, %c0_i32 : i32
    %41 = arith.extui %40 : i1 to i32
    %c0_i32_12 = arith.constant 0 : i32
    %42 = arith.cmpi ne, %41, %c0_i32_12 : i32
    scf.if %42 {
      %46 = vector.shape_cast %39 : vector<8x128xf32> to vector<1x8x128xf32>
      %cst_14 = arith.constant dense<0.000000e+00> : vector<8x128xf32>
      %47 = vector.multi_reduction <add>, %46, %cst_14 [0] : vector<1x8x128xf32> to vector<8x128xf32>
      %c0_15 = arith.constant 0 : index
      %c0_16 = arith.constant 0 : index
      %48 = vector.load %arg4[%c0_15, %c0_16] : memref<8x128xf32, #tpu.memory_space<vmem>>, vector<8x128xf32>
      tpu.vector_store %arg4[%c0_15, %c0_16], %47 {strides = array<i32>} : memref<8x128xf32, #tpu.memory_space<vmem>>, vector<8x128xf32>,
    } else {
    }
    %true = arith.constant true
    %43 = arith.xori %40, %true : i1
    %44 = arith.extui %43 : i1 to i32
    %c0_i32_13 = arith.constant 0 : i32
    %45 = arith.cmpi ne, %44, %c0_i32_13 : i32
    scf.if %45 {
      %46 = tpu.iota {dimensions = array<i32: 0>} : vector<8x128xi32>
      %c1_i32 = arith.constant 1 : i32
      %47 = vector.broadcast %c1_i32 : i32 to vector<8x128xi32>
      %48 = arith.cmpi slt, %46, %47 : vector<8x128xi32>
      %cst_14 = arith.constant 0.000000e+00 : f32
      %49 = vector.broadcast %cst_14 : f32 to vector<8x128xf32>
      %50 = arith.select %48, %39, %49 : vector<8x128xi1>, vector<8x128xf32>
      %51 = vector.shape_cast %50 : vector<8x128xf32> to vector<1x8x128xf32>
      %cst_15 = arith.constant dense<0.000000e+00> : vector<8x128xf32>
      %52 = vector.multi_reduction <add>, %51, %cst_15 [0] : vector<1x8x128xf32> to vector<8x128xf32>
      %c0_16 = arith.constant 0 : index
      %c0_17 = arith.constant 0 : index
      %53 = vector.load %arg4[%c0_16, %c0_17] : memref<8x128xf32, #tpu.memory_space<vmem>>, vector<8x128xf32>
      tpu.vector_store %arg4[%c0_16, %c0_17], %52 {strides = array<i32>} : memref<8x128xf32, #tpu.memory_space<vmem>>, vector<8x128xf32>,
    } else {
    }
    return
  }
  func.func @transform_0(%arg0: i32) -> (i32, i32) {
    %c0_i32 = arith.constant 0 : i32
    %c0_i32_0 = arith.constant 0 : i32
    return %arg0, %c0_i32 : i32, i32
  }
  func.func @transform_1(%arg0: i32) -> (i32, i32) {
    %c0_i32 = arith.constant 0 : i32
    %c0_i32_0 = arith.constant 0 : i32
    return %arg0, %c0_i32 : i32, i32
  }
  func.func @transform_2(%arg0: i32) -> (i32, i32) {
    %c0_i32 = arith.constant 0 : i32
    %c0_i32_0 = arith.constant 0 : i32
    %c0_i32_1 = arith.constant 0 : i32
    return %c0_i32, %c0_i32_0 : i32, i32
  }
  func.func @transform_3(%arg0: i32) -> (i32, i32) {
    %c0_i32 = arith.constant 0 : i32
    %c0_i32_0 = arith.constant 0 : i32
    return %arg0, %c0_i32 : i32, i32
  }
}

</mosaic_0001>

<llo_original>
// kernel: tpu_custom_call.1
$region0: #{tpu_custom_call.1}
  #allocation0 [shape = 'u32[]', space=smem, size = 0x4, offset = 0x4, fixed_abs, tag = 'smem constant byte address 0x4 - core index']
  #allocation1 [shape = 'u32[144,128]{1,0:T(1,128)}', space=vmem, size = 0x12000, scoped, tag = 'internal scratch']
  %s0 = inlined_call_operand.hbm [shape: f32[1,128], index: 0, kind: input, shape index: {}]
  %s1 = inlined_call_operand.vmem [shape: f32[1,128], index: 1, kind: input, shape index: {}]
  %s2 = inlined_call_operand.vmem [shape: f32[1,128], index: 2, kind: input, shape index: {}]
  %s3 = inlined_call_operand.hbm [shape: f32[8,128], index: 3, kind: output, shape index: {}]
  %s4 = sld [smem:[#allocation0]]
  $region34: #{tpu_custom_call.1} parent=0
    _
  %s6 = ssub.s32 1, %s4
  %s7 = scalar_select 0, %s6, %s4
  $region1: #{tpu_custom_call.1} parent=0
    #allocation2 [shape = 'u8[4096]{0}', space=vmem, size = 0x1000, scoped, tag = 'input window, operand 0, single buffered']
    #allocation3 [shape = 's32[1]{0}', space=sflag, size = 0x4, scoped, tag = 'scoped memory for tpu_custom_call.1']
    #allocation4 [shape = 's32[1]{0}', space=sflag, size = 0x4, scoped, tag = 'scoped memory for tpu_custom_call.1']
    #allocation5 [shape = 'u8[4096]{0}', space=vmem, size = 0x1000, scoped, tag = 'output window, operand 0, single buffered']
    %8 = vsyncpa [#allocation3], 0
    %9 = vsyncpa [#allocation4], 0
    // Predicated region
    $region2: #{tpu_custom_call.1} parent=1 // pred_check
      _
    $region3: #{tpu_custom_call.1} parent=1 // pred_check_branch
      %11 = sbr.rel (0) target = $region5
    $region4: #{tpu_custom_call.1} parent=1 // pred_region
      %s13 = ssub.s32 128, 16
      %14 = vsyncadd [#allocation3], %s13
      %s15 = sshll.u32 [#allocation2], 4
      %s16 = int_to_ptr.vmem [resolvable:$true] %s15
      %21 = dma.hbm_to_vmem [thread:$0]  %s0, 16, %s16, [#allocation3], 16, 16, 1
    $region5: #{tpu_custom_call.1} parent=1 // pred_fallthru
      _
    // Predicated region
    $region6: #{tpu_custom_call.1} parent=1 // pred_check
      _
    $region7: #{tpu_custom_call.1} parent=1 // pred_check_branch
      %23 = sbr.rel (0) target = $region9
    $region8: #{tpu_custom_call.1} parent=1 // pred_region
      _
    $region9: #{tpu_custom_call.1} parent=1 // pred_fallthru
      _
    // Predicated region
    $region10: #{tpu_custom_call.1} parent=1 // pred_check
      _
    $region11: #{tpu_custom_call.1} parent=1 // pred_check_branch
      %25 = sbr.rel (0) target = $region13
    $region12: #{tpu_custom_call.1} parent=1 // pred_region
      _
    $region13: #{tpu_custom_call.1} parent=1 // pred_fallthru
      _
    // Predicated region
    $region14: #{tpu_custom_call.1} parent=1 // pred_check
      _
    $region15: #{tpu_custom_call.1} parent=1 // pred_check_branch
      %27 = sbr.rel (0) target = $region17
    $region16: #{tpu_custom_call.1} parent=1 // pred_region
      %28 = dma.done [#allocation3], 128
    $region17: #{tpu_custom_call.1} parent=1 // pred_fallthru
      _
    %v29 = vld [vmem:[#allocation2] sm:$0xff]
    %v30 = vld [vmem:[%s1] sm:$0xff]
    %v31 = vld [vmem:[%s2] sm:$0x1]
    %v32 = vand.u32 2147483647, %v29
    %v33 = vsub.f32 0.0, %v32
    %v34 = vmul.f32 %v33, 1.442695
    %v35 = vpow.pop %v34
    %v36 = vadd.f32 %v35, 1.0
    %v37 = vrcp.pop %v36
    %vm38 = vcmp.ge.f32.partialorder %v29, 0.0
    %v39 = vmul.f32 %v35, %v37
    %v40 = vsel %vm38, %v37, %v39
    %v41 = vmax.f32 %v29, 0.0
    %v42 = vmul.f32 %v29, %v30
    %v43 = vsub.f32 %v41, %v42
    %v44 = vlog2.pop %v36
    %v45 = vmul.f32 %v44, 0.6931472
    %v46 = vadd.f32 %v43, %v45
    %v47 = vadd.f32 %v40, %v30
    %v48 = vmul.f32 %v40, %v30
    %v49 = vmul.f32 %v48, 2.0
    %v50 = vsub.f32 %v47, %v49
    %v51 = vmul.f32 %v50, %v50
    %v52 = vmul.f32 %v51, 0.25
    %v54 = vlaneseq
    %v55 = vshrl.u32 %v54, 7
    %v56 = vsub.s32 0, %v55
    %v57 = vrot.slane %v31, %v56
    %v59 = vadd.f32 %v57, %v52
    %v60 = vsub.f32 1.0, %v30
    %v61 = vmul.f32 %v40, %v40
    %v62 = vmul.f32 %v61, %v61
    %v63 = vmul.f32 %v60, %v62
    %v64 = vadd.f32 %v30, %v63
    %v65 = vmul.f32 %v64, 0.25
    %v66 = vadd.f32 %v59, %v65
    %v67 = vmul.f32 %v46, %v66
    %p68 = scmp.ne.s32.totalorder 0, 0
    // Predicated region
    $region18: #{tpu_custom_call.1} parent=1 // pred_check
      %p69 = pneg %p68
    $region19: #{tpu_custom_call.1} parent=1 // pred_check_branch
      %71 = sbr.rel (%p69) target = $region21
    $region20: #{tpu_custom_call.1} parent=1 // pred_region
      %v72 = vadd.f32 %v67, 0.0
      %73 = vst [vmem:[#allocation5] sm:$0xff] %v72
    $region21: #{tpu_custom_call.1} parent=1 // pred_fallthru
      _
    %p74 = scmp.eq.s32.totalorder 0, 0
    // Predicated region
    $region22: #{tpu_custom_call.1} parent=1 // pred_check
      %p75 = pneg %p74
    $region23: #{tpu_custom_call.1} parent=1 // pred_check_branch
      %77 = sbr.rel (%p75) target = $region25
    $region24: #{tpu_custom_call.1} parent=1 // pred_region
      %v78 = vlaneseq
      %v79 = vshrl.u32 %v78, 7
      %vm80 = vcmp.lt.s32.totalorder %v79, 1
      %v81 = vsel %vm80, %v67, 0.0
      %v82 = vadd.f32 %v81, 0.0
      %83 = vst [vmem:[#allocation5] sm:$0xff] %v82
    $region25: #{tpu_custom_call.1} parent=1 // pred_fallthru
      _
    // Predicated region
    $region26: #{tpu_custom_call.1} parent=1 // pred_check
      _
    $region27: #{tpu_custom_call.1} parent=1 // pred_check_branch
      %85 = sbr.rel (0) target = $region29
    $region28: #{tpu_custom_call.1} parent=1 // pred_region
      %s87 = ssub.s32 128, 128
      %88 = vsyncadd [#allocation4], %s87
      %s90 = sshll.u32 [#allocation5], 4
      %s91 = int_to_ptr.vmem [resolvable:$true] %s90
      %93 = dma.vmem_to_hbm [thread:$0]  %s91, 128, %s3, [#allocation4]
    $region29: #{tpu_custom_call.1} parent=1 // pred_fallthru
      _
    // Predicated region
    $region30: #{tpu_custom_call.1} parent=1 // pred_check
      _
    $region31: #{tpu_custom_call.1} parent=1 // pred_check_branch
      %95 = sbr.rel (0) target = $region33
    $region32: #{tpu_custom_call.1} parent=1 // pred_region
      %96 = dma.done [#allocation4], 128
    $region33: #{tpu_custom_call.1} parent=1 // pred_fallthru
      _
    %97 = vsyncpa [#allocation3], 1
    %98 = vsyncpa [#allocation4], 1

</llo_original>
